<compile_context>
chip_gen: v7x
topology: tpu7x:2x2x1
jax: 0.10.0
libtpu: 0.0.40
codegen_flags: <defaults>
</compile_context>

<pallas_src>
import functools

import jax
import jax.numpy as jnp
from jax import lax
from jax.experimental import pallas as pl
from jax.experimental.pallas import tpu as pltpu

_VMEM_BUDGET = 2 * 1024 * 1024  # bytes per block buffer (x4 with dbl-buffered in+out)


# ---------------------------------------------------------------------------
# Static tile-size helpers (all run at trace time on Python ints).
# ---------------------------------------------------------------------------
def _divisor_tiles(n, step):
    """All multiples of `step` that divide n (empty if n % step != 0)."""
    if n % step != 0:
        return []
    return [d for d in range(step, n + 1, step) if n % d == 0]


def _covering_tile(n, step, need):
    """Smallest multiple-of-`step` divisor of n that is >= need, else n."""
    cands = [d for d in _divisor_tiles(n, step) if d >= need]
    return min(cands) if cands else n


def _capped_tile(n, step, cap):
    """Largest multiple-of-`step` divisor of n that is <= max(cap, step), else n."""
    cands = [d for d in _divisor_tiles(n, step) if d <= max(cap, step)]
    return max(cands) if cands else n


def _batch_tile(b, cap):
    """Largest divisor of b that is <= cap (at least 1)."""
    best = 1
    for d in range(1, b + 1):
        if b % d == 0 and d <= cap:
            best = d
    return best


# ---------------------------------------------------------------------------
# Random mask bounds (torchaudio mask_along_axis, shared across the batch).
# ---------------------------------------------------------------------------
def _mask_bounds(key, F, T, freq_mask_param, time_mask_param):
    kf1, kf2, kt1, kt2 = jax.random.split(key, 4)
    fp = min(freq_mask_param, F)  # clamp so (len - width) can't go negative
    tp = min(time_mask_param, T)
    f_val = jax.random.uniform(kf1, (), jnp.float32) * fp
    f_min = jax.random.uniform(kf2, (), jnp.float32) * (F - f_val)
    t_val = jax.random.uniform(kt1, (), jnp.float32) * tp
    t_min = jax.random.uniform(kt2, (), jnp.float32) * (T - t_val)
    f_start = f_min.astype(jnp.int32)
    f_end = (f_min + f_val).astype(jnp.int32)
    t_start = t_min.astype(jnp.int32)
    t_end = (t_min + t_val).astype(jnp.int32)
    return f_start, f_end, t_start, t_end


# ---------------------------------------------------------------------------
# Kernels.  params (SMEM, int32):
#   [0]=f_start [1]=f_end [2]=t_start [3]=t_end
#   [4]=freq block idx 0  [5]=freq block idx 1
#   [6]=time block idx 0  [7]=time block idx 1
# ---------------------------------------------------------------------------
def _freq_mask_kernel(params_ref, x_ref, o_ref, *, blk_f):
    j = pl.program_id(2)  # which of the (<=2) candidate freq blocks
    fb = params_ref[4] + j * (params_ref[5] - params_ref[4])
    row0 = fb * blk_f     # absolute freq row of this block's first row
    f_start = params_ref[0]
    f_end = params_ref[1]

    x = x_ref[...]        # (tile_b, blk_f, tile_t)
    f_idx = row0 + lax.broadcasted_iota(jnp.int32, x.shape, 1)
    masked = (f_idx >= f_start) & (f_idx < f_end)
    o_ref[...] = jnp.where(masked, jnp.array(0, x.dtype), x)


def _time_mask_kernel(params_ref, x_ref, o_ref, *, tile_t):
    k = pl.program_id(1)  # which of the (<=2) candidate time blocks
    tb = params_ref[6] + k * (params_ref[7] - params_ref[6])
    col0 = tb * tile_t    # absolute time column of this block's first column
    t_start = params_ref[2]
    t_end = params_ref[3]

    x = x_ref[...]        # (tile_b, F, tile_t)
    t_idx = col0 + lax.broadcasted_iota(jnp.int32, x.shape, 2)
    masked = (t_idx >= t_start) & (t_idx < t_end)
    o_ref[...] = jnp.where(masked, jnp.array(0, x.dtype), x)


# ---------------------------------------------------------------------------
# Forward.
# ---------------------------------------------------------------------------
def spec_augment(x, key, freq_mask_param=8, time_mask_param=8, training=True):
    """SpecAugment forward.  x: (batch, freq, time)."""
    assert x.ndim == 3, "Input must be [batch, freq, time]"
    if not training:
        return x

    B, F, T = x.shape
    itemsize = jnp.dtype(x.dtype).itemsize
    fp = min(freq_mask_param, F)
    tp = min(time_mask_param, T)

    f_start, f_end, t_start, t_end = _mask_bounds(
        key, F, T, freq_mask_param, time_mask_param)

    # ---- static tile geometry -------------------------------------------
    # Freq pass: (tile_bf, blk_f, tile_tf) blocks; blk_f >= max mask width so
    # the freq strip fits inside at most two consecutive freq blocks.
    blk_f = _covering_tile(F, 8, fp)
    tile_tf = _capped_tile(
        T, 128, max(128, _VMEM_BUDGET // max(1, B * blk_f * itemsize)))
    tile_bf = _batch_tile(
        B, max(1, _VMEM_BUDGET // max(1, blk_f * tile_tf * itemsize)))
    # Time pass: (tile_bt, F, tile_tt) blocks; tile_tt >= max mask width so
    # the time strip fits inside at most two consecutive time blocks.
    tile_tt = _covering_tile(T, 128, tp)
    tile_bt = _batch_tile(
        B, max(1, _VMEM_BUDGET // max(1, F * tile_tt * itemsize)))
    # (If F % 8 != 0 or T % 128 != 0 the tiles fall back to the full dim,
    #  which is always a legal block shape.)

    n_fb = F // blk_f
    n_tt = T // tile_tt

    # Candidate block indices covering each strip (strip width <= one block,
    # so at most two consecutive blocks per axis can be touched; duplicates
    # when the strip fits in a single block are harmless / idempotent).
    fb0 = jnp.minimum(f_start // blk_f, n_fb - 1)
    fb1 = jnp.minimum(fb0 + 1, n_fb - 1)
    tb0 = jnp.minimum(t_start // tile_tt, n_tt - 1)
    tb1 = jnp.minimum(tb0 + 1, n_tt - 1)

    params = jnp.stack([f_start, f_end, t_start, t_end,
                        fb0, fb1, tb0, tb1]).astype(jnp.int32)

    out_shape = jax.ShapeDtypeStruct((B, F, T), x.dtype)

    # ---- pass 1: frequency mask (rows [f_start, f_end), all time) --------
    freq_spec = pl.BlockSpec(
        (tile_bf, blk_f, tile_tf),
        lambda b, t, j, p: (b, p[4] + j * (p[5] - p[4]), t))
    y = pl.pallas_call(
        functools.partial(_freq_mask_kernel, blk_f=blk_f),
        out_shape=out_shape,
        grid_spec=pltpu.PrefetchScalarGridSpec(
            num_scalar_prefetch=1,
            grid=(B // tile_bf, T // tile_tf, 2),
            in_specs=[freq_spec],
            out_specs=freq_spec),
        input_output_aliases={1: 0},  # params is arg 0, x is arg 1
        compiler_params=pltpu.CompilerParams(
            dimension_semantics=("parallel", "parallel", "arbitrary")),
    )(params, x)

    # ---- pass 2: time mask (cols [t_start, t_end), all freq) -------------
    time_spec = pl.BlockSpec(
        (tile_bt, F, tile_tt),
        lambda b, k, p: (b, 0, p[6] + k * (p[7] - p[6])))
    y = pl.pallas_call(
        functools.partial(_time_mask_kernel, tile_t=tile_tt),
        out_shape=out_shape,
        grid_spec=pltpu.PrefetchScalarGridSpec(
            num_scalar_prefetch=1,
            grid=(B // tile_bt, 2),
            in_specs=[time_spec],
            out_specs=time_spec),
        input_output_aliases={1: 0},
        compiler_params=pltpu.CompilerParams(
            dimension_semantics=("parallel", "arbitrary")),
    )(params, y)

    return y


if __name__ == "__main__":
    key = jax.random.PRNGKey(0)
    kx, kmask = jax.random.split(key)

    B, F, T = 2, 16, 256
    freq_mask_param, time_mask_param = 8, 8
    x = jax.random.normal(kx, (B, F, T), dtype=jnp.float32)

    # Training-mode forward (freq mask then time mask, strips only).
    y = spec_augment(x, kmask, freq_mask_param, time_mask_param, training=True)
    y = jax.block_until_ready(y)

    # Pure-JAX reference using the same deterministic mask bounds.
    f_start, f_end, t_start, t_end = _mask_bounds(
        kmask, F, T, freq_mask_param, time_mask_param)
    f_idx = jnp.arange(F, dtype=jnp.int32)[None, :, None]
    t_idx = jnp.arange(T, dtype=jnp.int32)[None, None, :]
    ref_mask = (((f_idx >= f_start) & (f_idx < f_end)) |
                ((t_idx >= t_start) & (t_idx < t_end)))
    y_ref = jnp.where(ref_mask, 0.0, x)

    assert y.shape == x.shape and y.dtype == x.dtype
    assert bool(jnp.all(y == y_ref)), "Pallas SpecAugment mismatch vs reference"

    # Eval-mode forward is the identity (no kernel launched).
    y_eval = jax.block_until_ready(spec_augment(x, kmask, training=False))
    assert bool(jnp.all(y_eval == x))

    print("KERNEL_OK")
</pallas_src>

<mosaic_0001>
module attributes {stable_mosaic.version = 11 : i64} {
  func.func @_freq_mask_kernel(%arg0: i32, %arg1: i32, %arg2: i32, %arg3: memref<8xi32, #tpu.memory_space<smem>>, %arg4: memref<2x8x256xf32, #tpu.memory_space<vmem>>, %arg5: memref<2x8x256xf32, #tpu.memory_space<vmem>>) attributes {dimension_semantics = [#tpu.dimension_semantics<parallel>, #tpu.dimension_semantics<parallel>, #tpu.dimension_semantics<arbitrary>], iteration_bounds = array<i64: 1, 1, 2>, scalar_prefetch = 1 : i64, scratch_operands = 0 : i64, tpu.core_type = #tpu.core_type<tc>, window_params = [{transform_indices = @transform_0, window_bounds = array<i64: 2, 8, 256>}, {transform_indices = @transform_1, window_bounds = array<i64: 2, 8, 256>}]} {
    %c4 = arith.constant 4 : index
    %0 = memref.load %arg3[%c4] : memref<8xi32, #tpu.memory_space<smem>>
    %c5 = arith.constant 5 : index
    %1 = memref.load %arg3[%c5] : memref<8xi32, #tpu.memory_space<smem>>
    %c4_0 = arith.constant 4 : index
    %2 = memref.load %arg3[%c4_0] : memref<8xi32, #tpu.memory_space<smem>>
    %3 = arith.subi %1, %2 : i32
    %4 = arith.muli %arg2, %3 : i32
    %5 = arith.addi %0, %4 : i32
    %c8_i32 = arith.constant 8 : i32
    %6 = arith.muli %5, %c8_i32 : i32
    %c0 = arith.constant 0 : index
    %7 = memref.load %arg3[%c0] : memref<8xi32, #tpu.memory_space<smem>>
    %c1 = arith.constant 1 : index
    %8 = memref.load %arg3[%c1] : memref<8xi32, #tpu.memory_space<smem>>
    %c0_1 = arith.constant 0 : index
    %c0_2 = arith.constant 0 : index
    %c0_3 = arith.constant 0 : index
    %9 = vector.load %arg4[%c0_1, %c0_2, %c0_3] : memref<2x8x256xf32, #tpu.memory_space<vmem>>, vector<2x8x256xf32>
    %10 = tpu.iota {dimensions = array<i32: 1>} : vector<2x8x256xi32>
    %11 = vector.broadcast %6 : i32 to vector<2x8x256xi32>
    %12 = arith.addi %11, %10 : vector<2x8x256xi32>
    %13 = vector.broadcast %7 : i32 to vector<2x8x256xi32>
    %14 = arith.cmpi sge, %12, %13 : vector<2x8x256xi32>
    %15 = vector.broadcast %8 : i32 to vector<2x8x256xi32>
    %16 = arith.cmpi slt, %12, %15 : vector<2x8x256xi32>
    %17 = arith.andi %14, %16 : vector<2x8x256xi1>
    %cst = arith.constant 0.000000e+00 : f32
    %18 = vector.broadcast %cst : f32 to vector<2x8x256xf32>
    %19 = arith.select %17, %18, %9 : vector<2x8x256xi1>, vector<2x8x256xf32>
    %c0_4 = arith.constant 0 : index
    %c0_5 = arith.constant 0 : index
    %c0_6 = arith.constant 0 : index
    %20 = vector.load %arg5[%c0_4, %c0_5, %c0_6] : memref<2x8x256xf32, #tpu.memory_space<vmem>>, vector<2x8x256xf32>
    tpu.vector_store %arg5[%c0_4, %c0_5, %c0_6], %19 {strides = array<i32>} : memref<2x8x256xf32, #tpu.memory_space<vmem>>, vector<2x8x256xf32>,
    return
  }
  func.func @transform_0(%arg0: i32, %arg1: i32, %arg2: i32, %arg3: memref<8xi32, #tpu.memory_space<smem>>) -> (i32, i32, i32) {
    %c4 = arith.constant 4 : index
    %0 = memref.load %arg3[%c4] : memref<8xi32, #tpu.memory_space<smem>>
    %c5 = arith.constant 5 : index
    %1 = memref.load %arg3[%c5] : memref<8xi32, #tpu.memory_space<smem>>
    %c4_0 = arith.constant 4 : index
    %2 = memref.load %arg3[%c4_0] : memref<8xi32, #tpu.memory_space<smem>>
    %3 = arith.subi %1, %2 : i32
    %4 = arith.muli %arg2, %3 : i32
    %5 = arith.addi %0, %4 : i32
    %c0_i32 = arith.constant 0 : i32
    return %arg0, %5, %arg1 : i32, i32, i32
  }
  func.func @transform_1(%arg0: i32, %arg1: i32, %arg2: i32, %arg3: memref<8xi32, #tpu.memory_space<smem>>) -> (i32, i32, i32) {
    %c4 = arith.constant 4 : index
    %0 = memref.load %arg3[%c4] : memref<8xi32, #tpu.memory_space<smem>>
    %c5 = arith.constant 5 : index
    %1 = memref.load %arg3[%c5] : memref<8xi32, #tpu.memory_space<smem>>
    %c4_0 = arith.constant 4 : index
    %2 = memref.load %arg3[%c4_0] : memref<8xi32, #tpu.memory_space<smem>>
    %3 = arith.subi %1, %2 : i32
    %4 = arith.muli %arg2, %3 : i32
    %5 = arith.addi %0, %4 : i32
    %c0_i32 = arith.constant 0 : i32
    return %arg0, %5, %arg1 : i32, i32, i32
  }
}

</mosaic_0001>

<llo_original>
// kernel: tpu_custom_call.1
$region0: #{tpu_custom_call.1}
  #allocation0 [shape = 'u32[]', space=smem, size = 0x4, offset = 0x4, fixed_abs, tag = 'smem constant byte address 0x4 - core index']
  #allocation1 [shape = 'u32[144,128]{1,0:T(1,128)}', space=vmem, size = 0x12000, scoped, tag = 'internal scratch']
  #allocation2 [shape = 's32[1]{0}', space=sflag, size = 0x4, scoped, tag = 'scoped memory for tpu_custom_call.1']
  #allocation3 [shape = 'u8[512]{0}', space=smem, size = 0x200, scoped, tag = 'prefetched SMEM operand 0']
  %s0 = inlined_call_operand.vmem [shape: s32[8], index: 0, kind: input, shape index: {}]
  %s1 = inlined_call_operand.hbm [shape: f32[2,16,256], index: 1, kind: input, shape index: {}, may-alias: {1,2}]
  %s2 = inlined_call_operand.hbm [shape: f32[2,16,256], index: 2, kind: output, shape index: {}, may-alias: {1,2}]
  %s3 = sld [smem:[#allocation0]]
  $region41: #{tpu_custom_call.1} parent=0
    _
  %s5 = ssub.s32 1, %s3
  %s6 = scalar_select 0, %s5, %s3
  %s7 = sshll.u32 %s0, 4
  %s8 = int_to_ptr.vmem [resolvable:$true] %s7
  %10 = dma.vmem_to_smem %s8, 16, [#allocation3], [#allocation2]
  %11 = dma.done [#allocation2], 16
  %12 = sfence
  $region1: #{tpu_custom_call.1} parent=0
    #allocation4 [shape = 'u8[32768]{0}', space=vmem, size = 0x8000, scoped, tag = 'input window, operand 1']
    #allocation5 [shape = 's32[2]{0}', space=sflag, size = 0x8, scoped, tag = 'scoped memory for tpu_custom_call.1']
    #allocation6 [shape = 's32[2]{0}', space=sflag, size = 0x8, scoped, tag = 'scoped memory for tpu_custom_call.1']
    #allocation7 [shape = 'u8[32768]{0}', space=vmem, size = 0x8000, scoped, tag = 'output window, operand 0']
    %13 = vsyncpa [#allocation5], 0
    %s14 = scalar_lea.sflag [#allocation5], 1
    %15 = vsyncpa %s14, 0
    %16 = vsyncpa [#allocation6], 0
    %s17 = scalar_lea.sflag [#allocation6], 1
    %18 = vsyncpa %s17, 0
    loop: start=0, step=1, limit=4
    $region2: #{tpu_custom_call.1} parent=1 // loop_pre_header
      _
    $region3: #{tpu_custom_call.1} parent=1 // loop_header
      %s20 = sphi 0, %s24
      %p21 = scmp.ge.s32.totalorder %s20, 4
      %s27 = sphi 0, %s46
      %s28 = sphi 0, %s42
      %s29 = sphi 0, %s38
      %s30 = sphi 0, %s27
      %s31 = sphi 0, %s28
      %s32 = sphi 0, %s29
      %s33 = sphi 0, %s30
      %s34 = sphi 0, %s31
      %s35 = sphi 0, %s32
      %s63 = sphi 0, %s65
      %s66 = sphi 0, %s63
      %s67 = sphi 0, %s66
      %s83 = sphi 0, %s67
      %s103 = sphi 0, %s105
      %s106 = sphi 0, %s103
      %s107 = sphi 0, %s106
      %s123 = sphi 0, %s107
    $region4: #{tpu_custom_call.1} parent=1 // loop_header_branch
      %23 = sbr.rel (%p21) target = $region8
    $region5: #{tpu_custom_call.1} parent=1 // loop_body
      %s25 = ssub.s32 %s20, 1
      %s26 = ssub.s32 %s20, 2
      %s36 = sadd.s32 1, %s29
      %p37 = scmp.ge.s32.totalorder %s36, 2
      %s38 = scalar_select %p37, 0, %s36
      %s39 = sadd.s32 1, %s28
      %s40 = scalar_select %p37, %s39, %s28
      %p41 = scmp.ge.s32.totalorder %s40, 1
      %s42 = scalar_select %p41, 0, %s40
      %s43 = sadd.s32 1, %s27
      %s44 = scalar_select %p41, %s43, %s27
      %p45 = scmp.ge.s32.totalorder %s44, 1
      %s46 = scalar_select %p45, 0, %s44
      %s47 = sld [smem:[#allocation3 + $0x4]]
      %s48 = sld [smem:[#allocation3 + $0x5]]
      %s49 = ssub.s32 %s48, %s47
      %s50 = smul.u32 %s29, %s49
      %s51 = sadd.s32 %s47, %s50
      %s52 = sld [smem:[#allocation3 + $0x4]]
      %s53 = sld [smem:[#allocation3 + $0x5]]
      %s54 = ssub.s32 %s53, %s52
      %s55 = smul.u32 %s38, %s54
      %s56 = sadd.s32 %s52, %s55
      %s57 = ssub.s32 %s27, %s46
      %s58 = ssub.s32 %s51, %s56
      %s59 = sor.u32 %s57, %s58
      %s60 = ssub.s32 %s28, %s42
      %s61 = sor.u32 %s59, %s60
      %p62 = scmp.eq.s32.totalorder %s61, 0
      %s64 = sadd.s32 %s63, 1
      %s65 = scalar_select %p62, %s63, %s64
      %p68 = pneg %p62
      %p69 = scmp.eq.s32.totalorder %s20, 1
      %p70 = por %p68, %p69
      %p71 = scmp.ne.s32.totalorder %s63, %s66
      %p72 = scmp.eq.s32.totalorder %s20, 0
      %p73 = por %p71, %p72
      %p74 = scmp.ne.s32.totalorder %s63, %s66
      %p75 = scmp.eq.s32.totalorder %s25, 1
      %p76 = por %p74, %p75
      %p77 = scmp.ne.s32.totalorder %s66, %s67
      %p78 = scmp.eq.s32.totalorder %s25, 0
      %p79 = por %p77, %p78
      %p80 = scmp.ne.s32.totalorder %s66, %s67
      %p81 = scmp.eq.s32.totalorder %s26, 1
      %p82 = por %p80, %p81
      %p84 = scmp.ne.s32.totalorder %s67, %s83
      %p85 = scmp.eq.s32.totalorder %s26, 0
      %p86 = por %p84, %p85
      %s87 = sld [smem:[#allocation3 + $0x4]]
      %s88 = sld [smem:[#allocation3 + $0x5]]
      %s89 = ssub.s32 %s88, %s87
      %s90 = smul.u32 %s29, %s89
      %s91 = sadd.s32 %s87, %s90
      %s92 = sld [smem:[#allocation3 + $0x4]]
      %s93 = sld [smem:[#allocation3 + $0x5]]
      %s94 = ssub.s32 %s93, %s92
      %s95 = smul.u32 %s38, %s94
      %s96 = sadd.s32 %s92, %s95
      %s97 = ssub.s32 %s27, %s46
      %s98 = ssub.s32 %s91, %s96
      %s99 = sor.u32 %s97, %s98
      %s100 = ssub.s32 %s28, %s42
      %s101 = sor.u32 %s99, %s100
      %p102 = scmp.eq.s32.totalorder %s101, 0
      %s104 = sadd.s32 %s103, 1
      %s105 = scalar_select %p102, %s103, %s104
      %p108 = pneg %p102
      %p109 = scmp.eq.s32.totalorder %s20, 1
      %p110 = por %p108, %p109
      %p111 = scmp.ne.s32.totalorder %s103, %s106
      %p112 = scmp.eq.s32.totalorder %s20, 0
      %p113 = por %p111, %p112
      %p114 = scmp.ne.s32.totalorder %s103, %s106
      %p115 = scmp.eq.s32.totalorder %s25, 1
      %p116 = por %p114, %p115
      %p117 = scmp.ne.s32.totalorder %s106, %s107
      %p118 = scmp.eq.s32.totalorder %s25, 0
      %p119 = por %p117, %p118
      %p120 = scmp.ne.s32.totalorder %s106, %s107
      %p121 = scmp.eq.s32.totalorder %s26, 1
      %p122 = por %p120, %p121
      %p124 = scmp.ne.s32.totalorder %s107, %s123
      %p125 = scmp.eq.s32.totalorder %s26, 0
      %p126 = por %p124, %p125
      %p127 = scmp.le.s32.totalorder 1, %s20
      %p128 = scmp.lt.s32.totalorder %s20, 3
      %p129 = pnand %p127, %p128
      %p130 = pneg %p129
      // Predicated region
      $region9: #{tpu_custom_call.1} parent=5 // pred_check
        _
      $region10: #{tpu_custom_call.1} parent=5 // pred_check_branch
        %132 = sbr.rel (%p129) target = $region12
      $region11: #{tpu_custom_call.1} parent=5 // pred_region
        %s133 = ssub.s32 %s20, 1
      $region12: #{tpu_custom_call.1} parent=5 // pred_fallthru
        _
      %p134 = scmp.lt.s32.totalorder %s20, 2
      // Predicated region
      $region13: #{tpu_custom_call.1} parent=5 // pred_check
        %p135 = pneg %p134
      $region14: #{tpu_custom_call.1} parent=5 // pred_check_branch
        %137 = sbr.rel (%p135) target = $region16
      $region15: #{tpu_custom_call.1} parent=5 // pred_region
        // Predicated region
        $region17: #{tpu_custom_call.1} parent=15 // pred_check
          %p138 = pneg %p73
        $region18: #{tpu_custom_call.1} parent=15 // pred_check_branch
          %140 = sbr.rel (%p138) target = $region20
        $region19: #{tpu_custom_call.1} parent=15 // pred_region
          %s141 = sand.u32 %s63, 1
          %s142 = scalar_lea.sflag [#allocation5], %s141
          %s143 = sand.u32 %s63, 1
          %s144 = smul.addr %s143, 32
          %s145 = scalar_lea.vmem [#allocation4], %s144
          %s146 = sld [smem:[#allocation3 + $0x4]]
          %s147 = sld [smem:[#allocation3 + $0x5]]
          %s148 = ssub.s32 %s147, %s146
          %s149 = smul.u32 %s29, %s148
          %s150 = sadd.s32 %s146, %s149
          %s151 = smul.u32 2, %s27
          %s152 = smul.u32 2, %s28
          %s154 = ssub.s32 512, 512
          %155 = vsyncadd %s142, %s154
          %s156 = smul.addr %s150, 2
          %s157 = sadd.s32 %s152, %s156
          %s158 = smul.addr %s151, 4
          %s159 = sadd.s32 %s157, %s158
          %s160 = smul.addr %s159, 128
          %s161 = scalar_lea.hbm %s1, %s160
          %s162 = sshll.u32 %s145, 4
          %s163 = int_to_ptr.vmem [resolvable:$true] %s162
          %168 = dma.hbm_to_vmem [thread:$0]  %s161, 512, %s163, %s142, 512, 256, 16
        $region20: #{tpu_custom_call.1} parent=15 // pred_fallthru
          _
      $region16: #{tpu_custom_call.1} parent=5 // pred_fallthru
        _
      %p169 = scmp.le.s32.totalorder 1, %s20
      %p170 = scmp.lt.s32.totalorder %s20, 3
      %p171 = pnand %p169, %p170
      %p172 = pneg %p171
      // Predicated region
      $region21: #{tpu_custom_call.1} parent=5 // pred_check
        _
      $region22: #{tpu_custom_call.1} parent=5 // pred_check_branch
        %174 = sbr.rel (%p171) target = $region24
      $region23: #{tpu_custom_call.1} parent=5 // pred_region
        %s175 = ssub.s32 %s20, 1
        %s176 = sand.u32 %s66, 1
        %s177 = scalar_lea.sflag [#allocation5], %s176
        %s178 = sand.u32 %s66, 1
        %s179 = smul.addr %s178, 32
        %s180 = scalar_lea.vmem [#allocation4], %s179
        // Predicated region
        $region25: #{tpu_custom_call.1} parent=23 // pred_check
          %p181 = pneg %p79
        $region26: #{tpu_custom_call.1} parent=23 // pred_check_branch
          %183 = sbr.rel (%p181) target = $region28
        $region27: #{tpu_custom_call.1} parent=23 // pred_region
          %184 = dma.done %s177, 512
        $region28: #{tpu_custom_call.1} parent=23 // pred_fallthru
          _
        %s185 = sand.u32 %s66, 1
        %s186 = scalar_lea.sflag [#allocation5], %s185
        %s187 = sand.u32 %s66, 1
        %s188 = smul.addr %s187, 32
        %s189 = scalar_lea.vmem [#allocation4], %s188
        %p190 = pneg %p79
        %p191 = pneg %p76
        %p192 = pneg %p119
        %p193 = pneg %p116
        %s194 = sand.u32 %s106, 1
        %s195 = scalar_lea.sflag [#allocation6], %s194
        %s196 = sand.u32 %s106, 1
        %s197 = smul.addr %s196, 32
        %s198 = scalar_lea.vmem [#allocation7], %s197
        %s199 = sld [smem:[#allocation3 + $0x4]]
        %s200 = sld [smem:[#allocation3 + $0x5]]
        %s201 = ssub.s32 %s200, %s199
        %s202 = smul.u32 %s32, %s201
        %s203 = sadd.s32 %s199, %s202
        %s204 = smul.u32 2, %s30
        %s205 = smul.u32 2, %s31
        %s206 = sld [smem:[#allocation3 + $0x4]]
        %s207 = sld [smem:[#allocation3 + $0x5]]
        %s208 = ssub.s32 %s207, %s206
        %s209 = smul.u32 %s32, %s208
        %s210 = sadd.s32 %s206, %s209
        %s211 = smul.u32 2, %s30
        %s212 = smul.u32 2, %s31
        %s213 = sld [smem:[#allocation3 + $0x4]]
        %s214 = sld [smem:[#allocation3 + $0x5]]
        %s215 = ssub.s32 %s214, %s213
        %s216 = smul.u32 %s32, %s215
        %s217 = sadd.s32 %s213, %s216
        %s218 = smul.u32 %s217, 8
        %s219 = sld [smem:[#allocation3]]
        %s220 = sld [smem:[#allocation3 + $0x1]]
        %v221 = vld [vmem:[%s180] sm:$0xff]
        %v222 = vld [vmem:[%s180 + $0x8] sm:$0xff]
        %v223 = vld [vmem:[%s180 + $0x10] sm:$0xff]
        %v224 = vld [vmem:[%s180 + $0x18] sm:$0xff]
        %v225 = vlaneseq
        %v226 = vshrl.u32 %v225, 7
        %v227 = vstv %s218
        %v228 = vadd.s32 %v227, %v226
        %v229 = vstv %s219
        %vm230 = vcmp.ge.s32.totalorder %v228, %v229
        %v231 = vstv %s220
        %vm232 = vcmp.lt.s32.totalorder %v228, %v231
        %vm233 = vmand %vm230, %vm232
        %v234 = vsel %vm233, 0.0, %v221
        %v235 = vsel %vm233, 0.0, %v222
        %v236 = vsel %vm233, 0.0, %v223
        %v237 = vsel %vm233, 0.0, %v224
        %238 = vst [vmem:[%s198] sm:$0xff] %v234
        %239 = vst [vmem:[%s198 + $0x8] sm:$0xff] %v235
        %240 = vst [vmem:[%s198 + $0x10] sm:$0xff] %v236
        %241 = vst [vmem:[%s198 + $0x18] sm:$0xff] %v237
        %s242 = sand.u32 %s106, 1
        %s243 = scalar_lea.sflag [#allocation6], %s242
        %s244 = sand.u32 %s106, 1
        %s245 = smul.addr %s244, 32
        %s246 = scalar_lea.vmem [#allocation7], %s245
        // Predicated region
        $region29: #{tpu_custom_call.1} parent=23 // pred_check
          %p247 = pneg %p116
        $region30: #{tpu_custom_call.1} parent=23 // pred_check_branch
          %249 = sbr.rel (%p247) target = $region32
        $region31: #{tpu_custom_call.1} parent=23 // pred_region
          %s250 = sld [smem:[#allocation3 + $0x4]]
          %s251 = sld [smem:[#allocation3 + $0x5]]
          %s252 = ssub.s32 %s251, %s250
          %s253 = smul.u32 %s32, %s252
          %s254 = sadd.s32 %s250, %s253
          %s255 = smul.u32 2, %s30
          %s256 = smul.u32 2, %s31
          %s258 = ssub.s32 512, 512
          %259 = vsyncadd %s243, %s258
          %s260 = smul.addr %s254, 2
          %s261 = sadd.s32 %s256, %s260
          %s262 = smul.addr %s255, 4
          %s263 = sadd.s32 %s261, %s262
          %s264 = smul.addr %s263, 128
          %s265 = scalar_lea.hbm %s2, %s264
          %s266 = sshll.u32 %s246, 4
          %s267 = int_to_ptr.vmem [resolvable:$true] %s266
          %272 = dma.vmem_to_hbm [thread:$0]  %s267, 512, %s265, %s243, 256, 512, 16
        $region32: #{tpu_custom_call.1} parent=23 // pred_fallthru
          _
      $region24: #{tpu_custom_call.1} parent=5 // pred_fallthru
        _
      %p273 = scmp.le.s32.totalorder 2, %s20
      // Predicated region
      $region33: #{tpu_custom_call.1} parent=5 // pred_check
        %p274 = pneg %p273
      $region34: #{tpu_custom_call.1} parent=5 // pred_check_branch
        %276 = sbr.rel (%p274) target = $region36
      $region35: #{tpu_custom_call.1} parent=5 // pred_region
        %s277 = ssub.s32 %s20, 2
        // Predicated region
        $region37: #{tpu_custom_call.1} parent=35 // pred_check
          %p278 = pneg %p122
        $region38: #{tpu_custom_call.1} parent=35 // pred_check_branch
          %280 = sbr.rel (%p278) target = $region40
        $region39: #{tpu_custom_call.1} parent=35 // pred_region
          %s281 = sand.u32 %s107, 1
          %s282 = scalar_lea.sflag [#allocation6], %s281
          %s283 = sand.u32 %s107, 1
          %s284 = smul.addr %s283, 32
          %s285 = scalar_lea.vmem [#allocation7], %s284
          %286 = dma.done %s282, 512
        $region40: #{tpu_custom_call.1} parent=35 // pred_fallthru
          _
      $region36: #{tpu_custom_call.1} parent=5 // pred_fallthru
        _
    $region6: #{tpu_custom_call.1} parent=1 // loop_footer
      %s24 = sadd.s32 1, %s20
    $region7: #{tpu_custom_call.1} parent=1 // loop_footer_branch
      %19 = sbr.rel target = $region3
    $region8: #{tpu_custom_call.1} parent=1 // loop_exit
      _
    %287 = vsyncpa [#allocation5], 1
    %s288 = scalar_lea.sflag [#allocation5], 1
    %289 = vsyncpa %s288, 1
    %290 = vsyncpa [#allocation6], 1
    %s291 = scalar_lea.sflag [#allocation6], 1
    %292 = vsyncpa %s291, 1

</llo_original>
